<compile_context>
chip_gen: v7x
topology: tpu7x:2x2x1
jax: 0.10.0
libtpu: 0.0.40
codegen_flags: <defaults>
</compile_context>

<pallas_src>
import functools

import jax
import jax.numpy as jnp
from jax.experimental import pallas as pl
from jax.experimental.pallas import tpu as pltpu


# ---------------------------------------------------------------------------
# Tiling helpers
# ---------------------------------------------------------------------------
def _round_up(x, m):
    return ((x + m - 1) // m) * m


def _choose_tile_b(batch, row_align, max_tile=512):
    """Pick (tile_b, padded_batch).

    tile_b is a multiple of `row_align` (8 for f32, 16 for bf16), capped at
    `max_tile`, and chosen so the grid has >= 2 steps whenever the batch is
    large enough (pipelining + v7x 2-TC sharding)."""
    if batch <= row_align:
        # Tiny batch: one full-extent block (allowed by the (8,128) rule).
        return batch, batch
    tile = min(max_tile, _round_up(batch, row_align))
    tile -= tile % row_align
    if _round_up(batch, tile) // tile < 2 and batch >= 2 * row_align:
        tile = max(row_align, _round_up((batch + 1) // 2, row_align))
    return tile, _round_up(batch, tile)


def _vmem_budget_bytes(tile_b, embedding_size, hidden_size, act_dtype, w_dtype):
    """Rough double-buffered footprint estimate, with headroom, clamped to a
    range that is safe on every generation (incl. v7x's 64 MiB physical)."""
    ab = jnp.dtype(act_dtype).itemsize
    wb = jnp.dtype(w_dtype).itemsize
    k = embedding_size + 2 * hidden_size
    acts = 2 * tile_b * k * ab                      # ne/s1/s2 tiles, double-buffered
    weights = 2 * k * 2 * hidden_size * wb          # fused weight, double-buffered
    bias = 2 * 2 * hidden_size * wb
    out = 2 * tile_b * hidden_size * ab
    est = acts + weights + bias + out
    return int(min(max(4 * est, 32 << 20), 64 << 20))


# ---------------------------------------------------------------------------
# Kernel
# ---------------------------------------------------------------------------
def _merge_kernel(ne_ref, s1_ref, s2_ref, w_ne_ref, w_s1_ref, w_s2_ref, b_ref,
                  o_ref, *, hidden_size):
    # Fused GEMM over pre-stacked weights (K, 2H), decomposed over the three
    # input segments so no (B, K) concat is ever materialized:
    #   [ne | s1 | s2] @ W_cat == ne @ W[:E] + s1 @ W[E:E+H] + s2 @ W[E+H:]
    acc = jnp.dot(ne_ref[...], w_ne_ref[...], preferred_element_type=jnp.float32)
    acc = acc + jnp.dot(s1_ref[...], w_s1_ref[...], preferred_element_type=jnp.float32)
    acc = acc + jnp.dot(s2_ref[...], w_s2_ref[...], preferred_element_type=jnp.float32)
    acc = acc + b_ref[...].astype(jnp.float32)

    h = acc[:, :hidden_size]      # merge   pre-activation
    g = acc[:, hidden_size:]      # merge_g pre-activation
    # sigmoid(g) = 1 / (1 + exp(-g)): exp on EUP, exact reciprocal (f32 math).
    gate = pl.reciprocal(1.0 + jnp.exp(-g), approx=False)
    o_ref[...] = (jnp.tanh(h) * gate).astype(o_ref.dtype)


# ---------------------------------------------------------------------------
# Parameter layout prep (done ONCE, off the forward hot path)
# ---------------------------------------------------------------------------
def prepare_merge_params(params, embedding_size, hidden_size, compute_dtype=None):
    """Fuse merge/merge_g into one (K, 2H) weight + (1, 2H) bias, pre-transposed
    to the (in, out) layout the MXU consumes, and split along K into the
    node_embedding / sub_tree_1 / sub_tree_2 segments."""
    H, E = hidden_size, embedding_size
    w_cat = jnp.concatenate([params["wm"].T, params["wg"].T], axis=1)    # (K, 2H)
    b_cat = jnp.concatenate([params["bm"], params["bg"]]).reshape(1, 2 * H)
    if compute_dtype is not None:
        w_cat = w_cat.astype(compute_dtype)
        b_cat = b_cat.astype(compute_dtype)
    return {
        "w_ne": w_cat[:E],          # (E, 2H)
        "w_s1": w_cat[E:E + H],     # (H, 2H)
        "w_s2": w_cat[E + H:],      # (H, 2H)
        "b": b_cat,                 # (1, 2H)
    }


# ---------------------------------------------------------------------------
# Forward
# ---------------------------------------------------------------------------
def merge_forward(node_embedding, sub_tree_1, sub_tree_2, prepared, *,
                  tile_b=None, max_tile_b=512):
    """Pallas-backed forward pass of Merge (eval mode)."""
    w_ne, w_s1, w_s2, b = (prepared["w_ne"], prepared["w_s1"],
                           prepared["w_s2"], prepared["b"])
    B, E = node_embedding.shape
    H = w_s1.shape[0]
    out_dtype = node_embedding.dtype

    row_align = 16 if out_dtype == jnp.bfloat16 else 8
    if tile_b is None:
        tile_b, B_pad = _choose_tile_b(B, row_align, max_tile_b)
    else:
        B_pad = _round_up(B, tile_b)

    if B_pad != B:
        pad = B_pad - B
        node_embedding = jnp.pad(node_embedding, ((0, pad), (0, 0)))
        sub_tree_1 = jnp.pad(sub_tree_1, ((0, pad), (0, 0)))
        sub_tree_2 = jnp.pad(sub_tree_2, ((0, pad), (0, 0)))

    grid = (B_pad // tile_b,)
    vmem_limit = _vmem_budget_bytes(tile_b, E, H, out_dtype, w_ne.dtype)

    out = pl.pallas_call(
        functools.partial(_merge_kernel, hidden_size=H),
        out_shape=jax.ShapeDtypeStruct((B_pad, H), out_dtype),
        grid_spec=pltpu.PrefetchScalarGridSpec(
            num_scalar_prefetch=0,
            grid=grid,
            in_specs=[
                pl.BlockSpec((tile_b, E), lambda i: (i, 0)),   # node_embedding tile
                pl.BlockSpec((tile_b, H), lambda i: (i, 0)),   # sub_tree_1 tile
                pl.BlockSpec((tile_b, H), lambda i: (i, 0)),   # sub_tree_2 tile
                pl.BlockSpec((E, 2 * H), lambda i: (0, 0)),    # fused W, ne segment
                pl.BlockSpec((H, 2 * H), lambda i: (0, 0)),    # fused W, s1 segment
                pl.BlockSpec((H, 2 * H), lambda i: (0, 0)),    # fused W, s2 segment
                pl.BlockSpec((1, 2 * H), lambda i: (0, 0)),    # fused bias
            ],
            out_specs=pl.BlockSpec((tile_b, H), lambda i: (i, 0)),
        ),
        compiler_params=pltpu.CompilerParams(
            dimension_semantics=("parallel",),
            vmem_limit_bytes=vmem_limit,
        ),
    )(node_embedding, sub_tree_1, sub_tree_2, w_ne, w_s1, w_s2, b)

    return out[:B] if B_pad != B else out


# ---------------------------------------------------------------------------
# Synthetic params + pure-JAX reference (PyTorch layout / math)
# ---------------------------------------------------------------------------
def init_merge_params(key, hidden_size, embedding_size, dtype=jnp.float32):
    """Deterministic synthetic params, shapes matching nn.Linear(2H+E, H)."""
    in_dim = hidden_size * 2 + embedding_size
    k1, k2, k3, k4 = jax.random.split(key, 4)
    scale = 1.0 / jnp.sqrt(in_dim)
    return {
        "wm": jax.random.uniform(k1, (hidden_size, in_dim), dtype, -scale, scale),
        "bm": jax.random.uniform(k2, (hidden_size,), dtype, -scale, scale),
        "wg": jax.random.uniform(k3, (hidden_size, in_dim), dtype, -scale, scale),
        "bg": jax.random.uniform(k4, (hidden_size,), dtype, -scale, scale),
    }


def merge_reference(node_embedding, sub_tree_1, sub_tree_2, params):
    x = jnp.concatenate([node_embedding, sub_tree_1, sub_tree_2], axis=1)
    t = jnp.tanh(x @ params["wm"].T + params["bm"])
    g = jax.nn.sigmoid(x @ params["wg"].T + params["bg"])
    return t * g


if __name__ == "__main__":
    hidden_size = 32
    embedding_size = 32
    batch = 24   # exercises >= 2 grid steps plus batch padding/unslicing

    key = jax.random.PRNGKey(0)
    kp, kn, k1, k2 = jax.random.split(key, 4)

    params = init_merge_params(kp, hidden_size, embedding_size)
    prepared = prepare_merge_params(params, embedding_size, hidden_size)

    node_embedding = jax.random.normal(kn, (batch, embedding_size), jnp.float32)
    sub_tree_1 = jax.random.normal(k1, (batch, hidden_size), jnp.float32)
    sub_tree_2 = jax.random.normal(k2, (batch, hidden_size), jnp.float32)

    out = merge_forward(node_embedding, sub_tree_1, sub_tree_2, prepared)
    out = jax.block_until_ready(out)

    ref = merge_reference(node_embedding, sub_tree_1, sub_tree_2, params)
    assert out.shape == (batch, hidden_size)
    assert jnp.allclose(out, ref, atol=1e-5, rtol=1e-5), "mismatch vs reference"

    print("KERNEL_OK")
</pallas_src>

<mosaic_0001>
module attributes {stable_mosaic.version = 11 : i64} {
  func.func @_merge_kernel(%arg0: i32, %arg1: memref<16x32xf32, #tpu.memory_space<vmem>>, %arg2: memref<16x32xf32, #tpu.memory_space<vmem>>, %arg3: memref<16x32xf32, #tpu.memory_space<vmem>>, %arg4: memref<32x64xf32, #tpu.memory_space<vmem>>, %arg5: memref<32x64xf32, #tpu.memory_space<vmem>>, %arg6: memref<32x64xf32, #tpu.memory_space<vmem>>, %arg7: memref<1x64xf32, #tpu.memory_space<vmem>>, %arg8: memref<16x32xf32, #tpu.memory_space<vmem>>) attributes {dimension_semantics = [#tpu.dimension_semantics<parallel>], iteration_bounds = array<i64: 2>, scalar_prefetch = 0 : i64, scratch_operands = 0 : i64, tpu.core_type = #tpu.core_type<tc>, window_params = [{transform_indices = @transform_0, window_bounds = array<i64: 16, 32>}, {transform_indices = @transform_1, window_bounds = array<i64: 16, 32>}, {transform_indices = @transform_2, window_bounds = array<i64: 16, 32>}, {pipeline_mode = #tpu.pipeline_mode<synchronous>, transform_indices = @transform_3, window_bounds = array<i64: 32, 64>}, {pipeline_mode = #tpu.pipeline_mode<synchronous>, transform_indices = @transform_4, window_bounds = array<i64: 32, 64>}, {pipeline_mode = #tpu.pipeline_mode<synchronous>, transform_indices = @transform_5, window_bounds = array<i64: 32, 64>}, {pipeline_mode = #tpu.pipeline_mode<synchronous>, transform_indices = @transform_6, window_bounds = array<i64: 1, 64>}, {transform_indices = @transform_7, window_bounds = array<i64: 16, 32>}]} {
    %c0 = arith.constant 0 : index
    %c0_0 = arith.constant 0 : index
    %0 = vector.load %arg1[%c0, %c0_0] : memref<16x32xf32, #tpu.memory_space<vmem>>, vector<16x32xf32>
    %c0_1 = arith.constant 0 : index
    %c0_2 = arith.constant 0 : index
    %1 = vector.load %arg4[%c0_1, %c0_2] : memref<32x64xf32, #tpu.memory_space<vmem>>, vector<32x64xf32>
    %cst = arith.constant dense<0.000000e+00> : vector<16x64xf32>
    %2 = tpu.matmul %0, %1, %cst {dimension_numbers = #tpu.dot_dimension_numbers<[1], [0], [0], [1], [0, 0, 1, 1], [], []>} : vector<16x32xf32>, vector<32x64xf32>, vector<16x64xf32> -> vector<16x64xf32>
    %c0_3 = arith.constant 0 : index
    %c0_4 = arith.constant 0 : index
    %3 = vector.load %arg2[%c0_3, %c0_4] : memref<16x32xf32, #tpu.memory_space<vmem>>, vector<16x32xf32>
    %c0_5 = arith.constant 0 : index
    %c0_6 = arith.constant 0 : index
    %4 = vector.load %arg5[%c0_5, %c0_6] : memref<32x64xf32, #tpu.memory_space<vmem>>, vector<32x64xf32>
    %cst_7 = arith.constant dense<0.000000e+00> : vector<16x64xf32>
    %5 = tpu.matmul %3, %4, %cst_7 {dimension_numbers = #tpu.dot_dimension_numbers<[1], [0], [0], [1], [0, 0, 1, 1], [], []>} : vector<16x32xf32>, vector<32x64xf32>, vector<16x64xf32> -> vector<16x64xf32>
    %6 = arith.addf %2, %5 : vector<16x64xf32>
    %c0_8 = arith.constant 0 : index
    %c0_9 = arith.constant 0 : index
    %7 = vector.load %arg3[%c0_8, %c0_9] : memref<16x32xf32, #tpu.memory_space<vmem>>, vector<16x32xf32>
    %c0_10 = arith.constant 0 : index
    %c0_11 = arith.constant 0 : index
    %8 = vector.load %arg6[%c0_10, %c0_11] : memref<32x64xf32, #tpu.memory_space<vmem>>, vector<32x64xf32>
    %cst_12 = arith.constant dense<0.000000e+00> : vector<16x64xf32>
    %9 = tpu.matmul %7, %8, %cst_12 {dimension_numbers = #tpu.dot_dimension_numbers<[1], [0], [0], [1], [0, 0, 1, 1], [], []>} : vector<16x32xf32>, vector<32x64xf32>, vector<16x64xf32> -> vector<16x64xf32>
    %10 = arith.addf %6, %9 : vector<16x64xf32>
    %c0_13 = arith.constant 0 : index
    %c0_14 = arith.constant 0 : index
    %11 = vector.load %arg7[%c0_13, %c0_14] : memref<1x64xf32, #tpu.memory_space<vmem>>, vector<1x64xf32>
    %12 = vector.broadcast %11 : vector<1x64xf32> to vector<16x64xf32>
    %13 = arith.addf %10, %12 : vector<16x64xf32>
    %14 = vector.extract_strided_slice %13 {offsets = [0, 0], sizes = [16, 32], strides = [1, 1]} : vector<16x64xf32> to vector<16x32xf32>
    %15 = vector.extract_strided_slice %13 {offsets = [0, 32], sizes = [16, 32], strides = [1, 1]} : vector<16x64xf32> to vector<16x32xf32>
    %cst_15 = arith.constant 0.000000e+00 : f32
    %16 = vector.broadcast %cst_15 : f32 to vector<16x32xf32>
    %17 = arith.subf %16, %15 : vector<16x32xf32>
    %18 = math.exp %17 : vector<16x32xf32>
    %cst_16 = arith.constant 1.000000e+00 : f32
    %19 = vector.broadcast %cst_16 : f32 to vector<16x32xf32>
    %20 = arith.addf %19, %18 : vector<16x32xf32>
    %21 = tpu.reciprocal %20 : vector<16x32xf32> -> vector<16x32xf32>
    %22 = math.tanh %14 : vector<16x32xf32>
    %23 = arith.mulf %22, %21 : vector<16x32xf32>
    %c0_17 = arith.constant 0 : index
    %c0_18 = arith.constant 0 : index
    %24 = vector.load %arg8[%c0_17, %c0_18] : memref<16x32xf32, #tpu.memory_space<vmem>>, vector<16x32xf32>
    tpu.vector_store %arg8[%c0_17, %c0_18], %23 {strides = array<i32>} : memref<16x32xf32, #tpu.memory_space<vmem>>, vector<16x32xf32>,
    return
  }
  func.func @transform_0(%arg0: i32) -> (i32, i32) {
    %c0_i32 = arith.constant 0 : i32
    %c0_i32_0 = arith.constant 0 : i32
    return %arg0, %c0_i32 : i32, i32
  }
  func.func @transform_1(%arg0: i32) -> (i32, i32) {
    %c0_i32 = arith.constant 0 : i32
    %c0_i32_0 = arith.constant 0 : i32
    return %arg0, %c0_i32 : i32, i32
  }
  func.func @transform_2(%arg0: i32) -> (i32, i32) {
    %c0_i32 = arith.constant 0 : i32
    %c0_i32_0 = arith.constant 0 : i32
    return %arg0, %c0_i32 : i32, i32
  }
  func.func @transform_3(%arg0: i32) -> (i32, i32) {
    %c0_i32 = arith.constant 0 : i32
    %c0_i32_0 = arith.constant 0 : i32
    %c0_i32_1 = arith.constant 0 : i32
    return %c0_i32, %c0_i32_0 : i32, i32
  }
  func.func @transform_4(%arg0: i32) -> (i32, i32) {
    %c0_i32 = arith.constant 0 : i32
    %c0_i32_0 = arith.constant 0 : i32
    %c0_i32_1 = arith.constant 0 : i32
    return %c0_i32, %c0_i32_0 : i32, i32
  }
  func.func @transform_5(%arg0: i32) -> (i32, i32) {
    %c0_i32 = arith.constant 0 : i32
    %c0_i32_0 = arith.constant 0 : i32
    %c0_i32_1 = arith.constant 0 : i32
    return %c0_i32, %c0_i32_0 : i32, i32
  }
  func.func @transform_6(%arg0: i32) -> (i32, i32) {
    %c0_i32 = arith.constant 0 : i32
    %c0_i32_0 = arith.constant 0 : i32
    %c0_i32_1 = arith.constant 0 : i32
    return %c0_i32, %c0_i32_0 : i32, i32
  }
  func.func @transform_7(%arg0: i32) -> (i32, i32) {
    %c0_i32 = arith.constant 0 : i32
    %c0_i32_0 = arith.constant 0 : i32
    return %arg0, %c0_i32 : i32, i32
  }
}

</mosaic_0001>

<llo_original>
// kernel: tpu_custom_call.1
$region0: #{tpu_custom_call.1}
  #allocation0 [shape = 'u32[]', space=smem, size = 0x4, offset = 0x4, fixed_abs, tag = 'smem constant byte address 0x4 - core index']
  #allocation1 [shape = 'u32[144,128]{1,0:T(1,128)}', space=vmem, size = 0x12000, scoped, tag = 'internal scratch']
  %s0 = inlined_call_operand.hbm [shape: f32[32,32], index: 0, kind: input, shape index: {}]
  %s1 = inlined_call_operand.hbm [shape: f32[32,32], index: 1, kind: input, shape index: {}]
  %s2 = inlined_call_operand.hbm [shape: f32[32,32], index: 2, kind: input, shape index: {}]
  %s3 = inlined_call_operand.hbm [shape: f32[32,64], index: 3, kind: input, shape index: {}]
  %s4 = inlined_call_operand.hbm [shape: f32[32,64], index: 4, kind: input, shape index: {}]
  %s5 = inlined_call_operand.hbm [shape: f32[32,64], index: 5, kind: input, shape index: {}]
  %s6 = inlined_call_operand.vmem [shape: f32[1,64], index: 6, kind: input, shape index: {}]
  %s7 = inlined_call_operand.hbm [shape: f32[32,32], index: 7, kind: output, shape index: {}]
  %s8 = sld [smem:[#allocation0]]
  $region85: #{tpu_custom_call.1} parent=0
    _
  %s10 = ssub.s32 1, %s8
  %s11 = scalar_select 0, %s10, %s8
  $region1: #{tpu_custom_call.1} parent=0
    #allocation2 [shape = 'u8[16384]{0}', space=vmem, size = 0x4000, scoped, tag = 'input window, operand 0']
    #allocation3 [shape = 's32[2]{0}', space=sflag, size = 0x8, scoped, tag = 'scoped memory for tpu_custom_call.1']
    #allocation4 [shape = 's32[2]{0}', space=sflag, size = 0x8, scoped, tag = 'scoped memory for tpu_custom_call.1']
    #allocation5 [shape = 'u8[16384]{0}', space=vmem, size = 0x4000, scoped, tag = 'input window, operand 1']
    #allocation6 [shape = 's32[2]{0}', space=sflag, size = 0x8, scoped, tag = 'scoped memory for tpu_custom_call.1']
    #allocation7 [shape = 'u8[16384]{0}', space=vmem, size = 0x4000, scoped, tag = 'input window, operand 2']
    #allocation8 [shape = 'u8[16384]{0}', space=vmem, size = 0x4000, scoped, tag = 'input window, operand 3, single buffered']
    #allocation9 [shape = 's32[1]{0}', space=sflag, size = 0x4, scoped, tag = 'scoped memory for tpu_custom_call.1']
    #allocation10 [shape = 'u8[16384]{0}', space=vmem, size = 0x4000, scoped, tag = 'input window, operand 4, single buffered']
    #allocation11 [shape = 'u8[16384]{0}', space=vmem, size = 0x4000, scoped, tag = 'input window, operand 5, single buffered']
    #allocation12 [shape = 's32[1]{0}', space=sflag, size = 0x4, scoped, tag = 'scoped memory for tpu_custom_call.1']
    #allocation13 [shape = 'u8[16384]{0}', space=vmem, size = 0x4000, scoped, tag = 'output window, operand 0']
    %12 = vsyncpa [#allocation3], 0
    %s13 = scalar_lea.sflag [#allocation3], 1
    %14 = vsyncpa %s13, 0
    %15 = vsyncpa [#allocation6], 0
    %s16 = scalar_lea.sflag [#allocation6], 1
    %17 = vsyncpa %s16, 0
    %18 = vsyncpa [#allocation9], 0
    %19 = vsyncpa [#allocation12], 0
    %20 = vsyncpa [#allocation4], 0
    %s21 = scalar_lea.sflag [#allocation4], 1
    %22 = vsyncpa %s21, 0
    loop: start=0, step=1, limit=4
    $region2: #{tpu_custom_call.1} parent=1 // loop_pre_header
      _
    $region3: #{tpu_custom_call.1} parent=1 // loop_header
      %s24 = sphi 0, %s28
      %p25 = scmp.ge.s32.totalorder %s24, 4
      %s34 = sphi 0, %s36
      %s37 = sphi 0, %s34
      %s38 = sphi 0, %s37
      %s54 = sphi 0, %s38
      %s60 = sphi 0, %s62
      %s63 = sphi 0, %s60
      %s64 = sphi 0, %s63
      %s80 = sphi 0, %s64
      %s86 = sphi 0, %s88
      %s89 = sphi 0, %s86
      %s90 = sphi 0, %s89
      %s106 = sphi 0, %s90
      %s110 = sphi 0, %s110
      %s112 = sphi 0, %s110
      %s113 = sphi 0, %s112
      %s127 = sphi 0, %s113
      %s131 = sphi 0, %s131
      %s133 = sphi 0, %s131
      %s134 = sphi 0, %s133
      %s148 = sphi 0, %s134
      %s152 = sphi 0, %s152
      %s154 = sphi 0, %s152
      %s155 = sphi 0, %s154
      %s169 = sphi 0, %s155
      %s173 = sphi 0, %s173
      %s175 = sphi 0, %s173
      %s176 = sphi 0, %s175
      %s190 = sphi 0, %s176
      %s196 = sphi 0, %s198
      %s199 = sphi 0, %s196
      %s200 = sphi 0, %s199
      %s216 = sphi 0, %s200
    $region4: #{tpu_custom_call.1} parent=1 // loop_header_branch
      %27 = sbr.rel (%p25) target = $region8
    $region5: #{tpu_custom_call.1} parent=1 // loop_body
      %s29 = ssub.s32 %s24, 1
      %s30 = ssub.s32 %s24, 2
      %s31 = sadd.s32 %s24, 1
      %s32 = ssub.s32 %s24, %s31
      %p33 = scmp.eq.s32.totalorder %s32, 0
      %s35 = sadd.s32 %s34, 1
      %s36 = scalar_select %p33, %s34, %s35
      %p39 = pneg %p33
      %p40 = scmp.eq.s32.totalorder %s24, 1
      %p41 = por %p39, %p40
      %p42 = scmp.ne.s32.totalorder %s34, %s37
      %p43 = scmp.eq.s32.totalorder %s24, 0
      %p44 = por %p42, %p43
      %p45 = scmp.ne.s32.totalorder %s34, %s37
      %p46 = scmp.eq.s32.totalorder %s29, 1
      %p47 = por %p45, %p46
      %p48 = scmp.ne.s32.totalorder %s37, %s38
      %p49 = scmp.eq.s32.totalorder %s29, 0
      %p50 = por %p48, %p49
      %p51 = scmp.ne.s32.totalorder %s37, %s38
      %p52 = scmp.eq.s32.totalorder %s30, 1
      %p53 = por %p51, %p52
      %p55 = scmp.ne.s32.totalorder %s38, %s54
      %p56 = scmp.eq.s32.totalorder %s30, 0
      %p57 = por %p55, %p56
      %s58 = ssub.s32 %s24, %s31
      %p59 = scmp.eq.s32.totalorder %s58, 0
      %s61 = sadd.s32 %s60, 1
      %s62 = scalar_select %p59, %s60, %s61
      %p65 = pneg %p59
      %p66 = scmp.eq.s32.totalorder %s24, 1
      %p67 = por %p65, %p66
      %p68 = scmp.ne.s32.totalorder %s60, %s63
      %p69 = scmp.eq.s32.totalorder %s24, 0
      %p70 = por %p68, %p69
      %p71 = scmp.ne.s32.totalorder %s60, %s63
      %p72 = scmp.eq.s32.totalorder %s29, 1
      %p73 = por %p71, %p72
      %p74 = scmp.ne.s32.totalorder %s63, %s64
      %p75 = scmp.eq.s32.totalorder %s29, 0
      %p76 = por %p74, %p75
      %p77 = scmp.ne.s32.totalorder %s63, %s64
      %p78 = scmp.eq.s32.totalorder %s30, 1
      %p79 = por %p77, %p78
      %p81 = scmp.ne.s32.totalorder %s64, %s80
      %p82 = scmp.eq.s32.totalorder %s30, 0
      %p83 = por %p81, %p82
      %s84 = ssub.s32 %s24, %s31
      %p85 = scmp.eq.s32.totalorder %s84, 0
      %s87 = sadd.s32 %s86, 1
      %s88 = scalar_select %p85, %s86, %s87
      %p91 = pneg %p85
      %p92 = scmp.eq.s32.totalorder %s24, 1
      %p93 = por %p91, %p92
      %p94 = scmp.ne.s32.totalorder %s86, %s89
      %p95 = scmp.eq.s32.totalorder %s24, 0
      %p96 = por %p94, %p95
      %p97 = scmp.ne.s32.totalorder %s86, %s89
      %p98 = scmp.eq.s32.totalorder %s29, 1
      %p99 = por %p97, %p98
      %p100 = scmp.ne.s32.totalorder %s89, %s90
      %p101 = scmp.eq.s32.totalorder %s29, 0
      %p102 = por %p100, %p101
      %p103 = scmp.ne.s32.totalorder %s89, %s90
      %p104 = scmp.eq.s32.totalorder %s30, 1
      %p105 = por %p103, %p104
      %p107 = scmp.ne.s32.totalorder %s90, %s106
      %p108 = scmp.eq.s32.totalorder %s30, 0
      %p109 = por %p107, %p108
      %s111 = sadd.s32 %s110, 1
      %p114 = scmp.eq.s32.totalorder %s24, 1
      %p115 = scmp.ne.s32.totalorder %s110, %s112
      %p116 = scmp.eq.s32.totalorder %s24, 0
      %p117 = por %p115, %p116
      %p118 = scmp.ne.s32.totalorder %s110, %s112
      %p119 = scmp.eq.s32.totalorder %s29, 1
      %p120 = por %p118, %p119
      %p121 = scmp.ne.s32.totalorder %s112, %s113
      %p122 = scmp.eq.s32.totalorder %s29, 0
      %p123 = por %p121, %p122
      %p124 = scmp.ne.s32.totalorder %s112, %s113
      %p125 = scmp.eq.s32.totalorder %s30, 1
      %p126 = por %p124, %p125
      %p128 = scmp.ne.s32.totalorder %s113, %s127
      %p129 = scmp.eq.s32.totalorder %s30, 0
      %p130 = por %p128, %p129
      %s132 = sadd.s32 %s131, 1
      %p135 = scmp.eq.s32.totalorder %s24, 1
      %p136 = scmp.ne.s32.totalorder %s131, %s133
      %p137 = scmp.eq.s32.totalorder %s24, 0
      %p138 = por %p136, %p137
      %p139 = scmp.ne.s32.totalorder %s131, %s133
      %p140 = scmp.eq.s32.totalorder %s29, 1
      %p141 = por %p139, %p140
      %p142 = scmp.ne.s32.totalorder %s133, %s134
      %p143 = scmp.eq.s32.totalorder %s29, 0
      %p144 = por %p142, %p143
      %p145 = scmp.ne.s32.totalorder %s133, %s134
      %p146 = scmp.eq.s32.totalorder %s30, 1
      %p147 = por %p145, %p146
      %p149 = scmp.ne.s32.totalorder %s134, %s148
      %p150 = scmp.eq.s32.totalorder %s30, 0
      %p151 = por %p149, %p150
      %s153 = sadd.s32 %s152, 1
      %p156 = scmp.eq.s32.totalorder %s24, 1
      %p157 = scmp.ne.s32.totalorder %s152, %s154
      %p158 = scmp.eq.s32.totalorder %s24, 0
      %p159 = por %p157, %p158
      %p160 = scmp.ne.s32.totalorder %s152, %s154
      %p161 = scmp.eq.s32.totalorder %s29, 1
      %p162 = por %p160, %p161
      %p163 = scmp.ne.s32.totalorder %s154, %s155
      %p164 = scmp.eq.s32.totalorder %s29, 0
      %p165 = por %p163, %p164
      %p166 = scmp.ne.s32.totalorder %s154, %s155
      %p167 = scmp.eq.s32.totalorder %s30, 1
      %p168 = por %p166, %p167
      %p170 = scmp.ne.s32.totalorder %s155, %s169
      %p171 = scmp.eq.s32.totalorder %s30, 0
      %p172 = por %p170, %p171
      %s174 = sadd.s32 %s173, 1
      %p177 = scmp.eq.s32.totalorder %s24, 1
      %p178 = scmp.ne.s32.totalorder %s173, %s175
      %p179 = scmp.eq.s32.totalorder %s24, 0
      %p180 = por %p178, %p179
      %p181 = scmp.ne.s32.totalorder %s173, %s175
      %p182 = scmp.eq.s32.totalorder %s29, 1
      %p183 = por %p181, %p182
      %p184 = scmp.ne.s32.totalorder %s175, %s176
      %p185 = scmp.eq.s32.totalorder %s29, 0
      %p186 = por %p184, %p185
      %p187 = scmp.ne.s32.totalorder %s175, %s176
      %p188 = scmp.eq.s32.totalorder %s30, 1
      %p189 = por %p187, %p188
      %p191 = scmp.ne.s32.totalorder %s176, %s190
      %p192 = scmp.eq.s32.totalorder %s30, 0
      %p193 = por %p191, %p192
      %s194 = ssub.s32 %s24, %s31
      %p195 = scmp.eq.s32.totalorder %s194, 0
      %s197 = sadd.s32 %s196, 1
      %s198 = scalar_select %p195, %s196, %s197
      %p201 = pneg %p195
      %p202 = scmp.eq.s32.totalorder %s24, 1
      %p203 = por %p201, %p202
      %p204 = scmp.ne.s32.totalorder %s196, %s199
      %p205 = scmp.eq.s32.totalorder %s24, 0
      %p206 = por %p204, %p205
      %p207 = scmp.ne.s32.totalorder %s196, %s199
      %p208 = scmp.eq.s32.totalorder %s29, 1
      %p209 = por %p207, %p208
      %p210 = scmp.ne.s32.totalorder %s199, %s200
      %p211 = scmp.eq.s32.totalorder %s29, 0
      %p212 = por %p210, %p211
      %p213 = scmp.ne.s32.totalorder %s199, %s200
      %p214 = scmp.eq.s32.totalorder %s30, 1
      %p215 = por %p213, %p214
      %p217 = scmp.ne.s32.totalorder %s200, %s216
      %p218 = scmp.eq.s32.totalorder %s30, 0
      %p219 = por %p217, %p218
      %p220 = scmp.le.s32.totalorder 1, %s24
      %p221 = scmp.lt.s32.totalorder %s24, 3
      %p222 = pnand %p220, %p221
      %p223 = pneg %p222
      // Predicated region
      $region9: #{tpu_custom_call.1} parent=5 // pred_check
        _
      $region10: #{tpu_custom_call.1} parent=5 // pred_check_branch
        %225 = sbr.rel (%p222) target = $region12
      $region11: #{tpu_custom_call.1} parent=5 // pred_region
        %s226 = ssub.s32 %s24, 1
        // Predicated region
        $region13: #{tpu_custom_call.1} parent=11 // pred_check
          %p227 = pneg %p123
        $region14: #{tpu_custom_call.1} parent=11 // pred_check_branch
          %229 = sbr.rel (%p227) target = $region16
        $region15: #{tpu_custom_call.1} parent=11 // pred_region
          %s231 = ssub.s32 512, 512
          %232 = vsyncadd [#allocation9], %s231
          %s233 = sshll.u32 [#allocation8], 4
          %s234 = int_to_ptr.vmem [resolvable:$true] %s233
          %239 = dma.hbm_to_vmem [thread:$0]  %s3, 512, %s234, [#allocation9], 128, 128, 8
        $region16: #{tpu_custom_call.1} parent=11 // pred_fallthru
          _
        // Predicated region
        $region17: #{tpu_custom_call.1} parent=11 // pred_check
          %p240 = pneg %p144
        $region18: #{tpu_custom_call.1} parent=11 // pred_check_branch
          %242 = sbr.rel (%p240) target = $region20
        $region19: #{tpu_custom_call.1} parent=11 // pred_region
          %s244 = ssub.s32 512, 512
          %245 = vsyncadd [#allocation9], %s244
          %s246 = sshll.u32 [#allocation10], 4
          %s247 = int_to_ptr.vmem [resolvable:$true] %s246
          %252 = dma.hbm_to_vmem [thread:$0]  %s4, 512, %s247, [#allocation9], 128, 128, 8
        $region20: #{tpu_custom_call.1} parent=11 // pred_fallthru
          _
        // Predicated region
        $region21: #{tpu_custom_call.1} parent=11 // pred_check
          %p253 = pneg %p165
        $region22: #{tpu_custom_call.1} parent=11 // pred_check_branch
          %255 = sbr.rel (%p253) target = $region24
        $region23: #{tpu_custom_call.1} parent=11 // pred_region
          %s257 = ssub.s32 512, 512
          %258 = vsyncadd [#allocation12], %s257
          %s259 = sshll.u32 [#allocation11], 4
          %s260 = int_to_ptr.vmem [resolvable:$true] %s259
          %265 = dma.hbm_to_vmem [thread:$0]  %s5, 512, %s260, [#allocation12], 128, 128, 8
        $region24: #{tpu_custom_call.1} parent=11 // pred_fallthru
          _
        // Predicated region
        $region25: #{tpu_custom_call.1} parent=11 // pred_check
          %p266 = pneg %p186
        $region26: #{tpu_custom_call.1} parent=11 // pred_check_branch
          %268 = sbr.rel (%p266) target = $region28
        $region27: #{tpu_custom_call.1} parent=11 // pred_region
          _
        $region28: #{tpu_custom_call.1} parent=11 // pred_fallthru
          _
      $region12: #{tpu_custom_call.1} parent=5 // pred_fallthru
        _
      %p269 = scmp.lt.s32.totalorder %s24, 2
      // Predicated region
      $region29: #{tpu_custom_call.1} parent=5 // pred_check
        %p270 = pneg %p269
      $region30: #{tpu_custom_call.1} parent=5 // pred_check_branch
        %272 = sbr.rel (%p270) target = $region32
      $region31: #{tpu_custom_call.1} parent=5 // pred_region
        // Predicated region
        $region33: #{tpu_custom_call.1} parent=31 // pred_check
          %p273 = pneg %p44
        $region34: #{tpu_custom_call.1} parent=31 // pred_check_branch
          %275 = sbr.rel (%p273) target = $region36
        $region35: #{tpu_custom_call.1} parent=31 // pred_region
          %s276 = sand.u32 %s34, 1
          %s277 = scalar_lea.sflag [#allocation3], %s276
          %s278 = sand.u32 %s34, 1
          %s279 = smul.addr %s278, 16
          %s280 = scalar_lea.vmem [#allocation2], %s279
          %s281 = smul.u32 2, %s24
          %s283 = ssub.s32 256, 256
          %284 = vsyncadd %s277, %s283
          %s285 = smul.addr %s281, 128
          %s286 = scalar_lea.hbm %s0, %s285
          %s287 = sshll.u32 %s280, 4
          %s288 = int_to_ptr.vmem [resolvable:$true] %s287
          %293 = dma.hbm_to_vmem [thread:$0]  %s286, 256, %s288, %s277, 128, 128, 8
        $region36: #{tpu_custom_call.1} parent=31 // pred_fallthru
          _
        // Predicated region
        $region37: #{tpu_custom_call.1} parent=31 // pred_check
          %p294 = pneg %p70
        $region38: #{tpu_custom_call.1} parent=31 // pred_check_branch
          %296 = sbr.rel (%p294) target = $region40
        $region39: #{tpu_custom_call.1} parent=31 // pred_region
          %s297 = sand.u32 %s24, 1
          %s298 = scalar_lea.sflag [#allocation6], %s297
          %s299 = sand.u32 %s60, 1
          %s300 = smul.addr %s299, 16
          %s301 = scalar_lea.vmem [#allocation5], %s300
          %s302 = smul.u32 2, %s24
          %s304 = ssub.s32 256, 256
          %305 = vsyncadd %s298, %s304
          %s306 = smul.addr %s302, 128
          %s307 = scalar_lea.hbm %s1, %s306
          %s308 = sshll.u32 %s301, 4
          %s309 = int_to_ptr.vmem [resolvable:$true] %s308
          %314 = dma.hbm_to_vmem [thread:$0]  %s307, 256, %s309, %s298, 128, 128, 8
        $region40: #{tpu_custom_call.1} parent=31 // pred_fallthru
          _
        // Predicated region
        $region41: #{tpu_custom_call.1} parent=31 // pred_check
          %p315 = pneg %p96
        $region42: #{tpu_custom_call.1} parent=31 // pred_check_branch
          %317 = sbr.rel (%p315) target = $region44
        $region43: #{tpu_custom_call.1} parent=31 // pred_region
          %s318 = sand.u32 %s24, 1
          %s319 = scalar_lea.sflag [#allocation6], %s318
          %s320 = sand.u32 %s86, 1
          %s321 = smul.addr %s320, 16
          %s322 = scalar_lea.vmem [#allocation7], %s321
          %s323 = smul.u32 2, %s24
          %s325 = ssub.s32 256, 256
          %326 = vsyncadd %s319, %s325
          %s327 = smul.addr %s323, 128
          %s328 = scalar_lea.hbm %s2, %s327
          %s329 = sshll.u32 %s322, 4
          %s330 = int_to_ptr.vmem [resolvable:$true] %s329
          %335 = dma.hbm_to_vmem [thread:$0]  %s328, 256, %s330, %s319, 128, 128, 8
        $region44: #{tpu_custom_call.1} parent=31 // pred_fallthru
          _
      $region32: #{tpu_custom_call.1} parent=5 // pred_fallthru
        _
      %p336 = scmp.le.s32.totalorder 1, %s24
      %p337 = scmp.lt.s32.totalorder %s24, 3
      %p338 = pnand %p336, %p337
      %p339 = pneg %p338
      // Predicated region
      $region45: #{tpu_custom_call.1} parent=5 // pred_check
        _
      $region46: #{tpu_custom_call.1} parent=5 // pred_check_branch
        %341 = sbr.rel (%p338) target = $region48
      $region47: #{tpu_custom_call.1} parent=5 // pred_region
        %s342 = ssub.s32 %s24, 1
        %s343 = sand.u32 %s37, 1
        %s344 = scalar_lea.sflag [#allocation3], %s343
        %s345 = sand.u32 %s37, 1
        %s346 = smul.addr %s345, 16
        %s347 = scalar_lea.vmem [#allocation2], %s346
        // Predicated region
        $region49: #{tpu_custom_call.1} parent=47 // pred_check
          %p348 = pneg %p50
        $region50: #{tpu_custom_call.1} parent=47 // pred_check_branch
          %350 = sbr.rel (%p348) target = $region52
        $region51: #{tpu_custom_call.1} parent=47 // pred_region
          %351 = dma.done %s344, 256
        $region52: #{tpu_custom_call.1} parent=47 // pred_fallthru
          _
        %s352 = sand.u32 %s29, 1
        %s353 = scalar_lea.sflag [#allocation6], %s352
        %s354 = sand.u32 %s63, 1
        %s355 = smul.addr %s354, 16
        %s356 = scalar_lea.vmem [#allocation5], %s355
        // Predicated region
        $region53: #{tpu_custom_call.1} parent=47 // pred_check
          %p357 = pneg %p76
        $region54: #{tpu_custom_call.1} parent=47 // pred_check_branch
          %359 = sbr.rel (%p357) target = $region56
        $region55: #{tpu_custom_call.1} parent=47 // pred_region
          %360 = dma.done %s353, 256
        $region56: #{tpu_custom_call.1} parent=47 // pred_fallthru
          _
        %s361 = sand.u32 %s29, 1
        %s362 = scalar_lea.sflag [#allocation6], %s361
        %s363 = sand.u32 %s89, 1
        %s364 = smul.addr %s363, 16
        %s365 = scalar_lea.vmem [#allocation7], %s364
        // Predicated region
        $region57: #{tpu_custom_call.1} parent=47 // pred_check
          %p366 = pneg %p102
        $region58: #{tpu_custom_call.1} parent=47 // pred_check_branch
          %368 = sbr.rel (%p366) target = $region60
        $region59: #{tpu_custom_call.1} parent=47 // pred_region
          %369 = dma.done %s362, 256
        $region60: #{tpu_custom_call.1} parent=47 // pred_fallthru
          _
        // Predicated region
        $region61: #{tpu_custom_call.1} parent=47 // pred_check
          %p370 = pneg %p123
        $region62: #{tpu_custom_call.1} parent=47 // pred_check_branch
          %372 = sbr.rel (%p370) target = $region64
        $region63: #{tpu_custom_call.1} parent=47 // pred_region
          %373 = dma.done [#allocation9], 512
        $region64: #{tpu_custom_call.1} parent=47 // pred_fallthru
          _
        // Predicated region
        $region65: #{tpu_custom_call.1} parent=47 // pred_check
          %p374 = pneg %p144
        $region66: #{tpu_custom_call.1} parent=47 // pred_check_branch
          %376 = sbr.rel (%p374) target = $region68
        $region67: #{tpu_custom_call.1} parent=47 // pred_region
          %377 = dma.done [#allocation9], 512
        $region68: #{tpu_custom_call.1} parent=47 // pred_fallthru
          _
        // Predicated region
        $region69: #{tpu_custom_call.1} parent=47 // pred_check
          %p378 = pneg %p165
        $region70: #{tpu_custom_call.1} parent=47 // pred_check_branch
          %380 = sbr.rel (%p378) target = $region72
        $region71: #{tpu_custom_call.1} parent=47 // pred_region
          %381 = dma.done [#allocation12], 512
        $region72: #{tpu_custom_call.1} parent=47 // pred_fallthru
          _
        %s382 = sand.u32 %s37, 1
        %s383 = scalar_lea.sflag [#allocation3], %s382
        %s384 = sand.u32 %s37, 1
        %s385 = smul.addr %s384, 16
        %s386 = scalar_lea.vmem [#allocation2], %s385
        %p387 = pneg %p50
        %p388 = pneg %p47
        %s389 = sand.u32 %s29, 1
        %s390 = scalar_lea.sflag [#allocation6], %s389
        %s391 = sand.u32 %s63, 1
        %s392 = smul.addr %s391, 16
        %s393 = scalar_lea.vmem [#allocation5], %s392
        %p394 = pneg %p76
        %p395 = pneg %p73
        %s396 = sand.u32 %s29, 1
        %s397 = scalar_lea.sflag [#allocation6], %s396
        %s398 = sand.u32 %s89, 1
        %s399 = smul.addr %s398, 16
        %s400 = scalar_lea.vmem [#allocation7], %s399
        %p401 = pneg %p102
        %p402 = pneg %p99
        %p403 = pneg %p123
        %p404 = pneg %p120
        %p405 = pneg %p144
        %p406 = pneg %p141
        %p407 = pneg %p165
        %p408 = pneg %p162
        %p409 = pneg %p186
        %p410 = pneg %p183
        %p411 = pneg %p212
        %p412 = pneg %p209
        %s413 = sand.u32 %s199, 1
        %s414 = scalar_lea.sflag [#allocation4], %s413
        %s415 = sand.u32 %s199, 1
        %s416 = smul.addr %s415, 16
        %s417 = scalar_lea.vmem [#allocation13], %s416
        %s418 = smul.u32 2, %s29
        %s419 = smul.u32 2, %s29
        %s420 = smul.u32 2, %s29
        %s421 = smul.u32 2, %s29
        %v422 = vld [vmem:[%s347] sm:$0xff]
        %v423 = vld [vmem:[%s347 + $0x8] sm:$0xff]
        %v424 = vld [vmem:[#allocation8] sm:$0xff]
        %v425 = vld [vmem:[#allocation8 + $0x8] sm:$0xff]
        %v426 = vld [vmem:[#allocation8 + $0x10] sm:$0xff]
        %v427 = vld [vmem:[#allocation8 + $0x18] sm:$0xff]
        %v428 = vld [vmem:[%s356] sm:$0xff]
        %v429 = vld [vmem:[%s356 + $0x8] sm:$0xff]
        %v430 = vld [vmem:[#allocation10] sm:$0xff]
        %v431 = vld [vmem:[#allocation10 + $0x8] sm:$0xff]
        %v432 = vld [vmem:[#allocation10 + $0x10] sm:$0xff]
        %v433 = vld [vmem:[#allocation10 + $0x18] sm:$0xff]
        %vm434 = vcmask 261120
        %v436 = vsel %vm434, %v428, 0
        %v439 = vsel %vm434, %v429, 0
        %441 = vmatprep.subr.mxu0 0.0
        %442 = vmatpush1.msra.mxu0 %v430
        %443 = vmatprep.subr.mxu0 0.0
        %444 = vmatpush1.msra.mxu0 %v431
        %445 = vmatprep.subr.mxu0 0.0
        %446 = vmatpush1.msra.mxu0 %v432
        %447 = vmatprep.subr.mxu0 0.0
        %448 = vmatpush1.msra.mxu0 %v433
        %449 = vmatprep.subr.mxu0 0.0
        %450 = vmatpush1.msra.mxu0 0.0
        %451 = vmatprep.subr.mxu0 0.0
        %452 = vmatpush1.msra.mxu0 0.0
        %453 = vmatprep.subr.mxu0 0.0
        %454 = vmatpush1.msra.mxu0 0.0
        %455 = vmatprep.subr.mxu0 0.0
        %456 = vmatpush1.msra.mxu0 0.0
        %457 = vmatprep.subr.mxu0 0.0
        %458 = vmatpush1.msra.mxu0 0.0
        %459 = vmatprep.subr.mxu0 0.0
        %460 = vmatpush1.msra.mxu0 0.0
        %461 = vmatprep.subr.mxu0 0.0
        %462 = vmatpush1.msra.mxu0 0.0
        %463 = vmatprep.subr.mxu0 0.0
        %464 = vmatpush1.msra.mxu0 0.0
        %465 = vmatprep.subr.mxu0 0.0
        %466 = vmatpush1.msra.mxu0 0.0
        %467 = vmatprep.subr.mxu0 0.0
        %468 = vmatpush1.msra.mxu0 0.0
        %469 = vmatprep.subr.mxu0 0.0
        %470 = vmatpush1.msra.mxu0 0.0
        %471 = vmatprep.subr.mxu0 0.0
        %472 = vmatpush1.msra.mxu0 0.0
        %473 = vmatprep.subr.mxu0 0.0
        %474 = vmatpush1.msra.mxu0 0.0
        %475 = vmatprep.subr.mxu0 0.0
        %476 = vmatpush1.msra.mxu0 0.0
        %477 = vmatprep.subr.mxu0 0.0
        %478 = vmatpush1.msra.mxu0 0.0
        %479 = vmatprep.subr.mxu0 0.0
        %480 = vmatpush1.msra.mxu0 0.0
        %481 = vmatprep.subr.mxu0 0.0
        %482 = vmatpush1.msra.mxu0 0.0
        %483 = vmatprep.subr.mxu0 0.0
        %484 = vmatpush1.msra.mxu0 0.0
        %485 = vmatprep.subr.mxu0 0.0
        %486 = vmatpush1.msra.mxu0 0.0
        %487 = vmatprep.subr.mxu0 0.0
        %488 = vmatpush1.msra.mxu0 0.0
        %489 = vmatprep.subr.mxu0 0.0
        %490 = vmatpush1.msra.mxu0 0.0
        %491 = vmatprep.subr.mxu0 0.0
        %492 = vmatpush1.msra.mxu0 0.0
        %493 = vmatprep.subr.mxu0 0.0
        %494 = vmatpush1.msra.mxu0 0.0
        %495 = vmatprep.subr.mxu0 0.0
        %496 = vmatpush1.msra.mxu0 0.0
        %497 = vmatprep.subr.mxu0 0.0
        %498 = vmatpush1.msra.mxu0 0.0
        %499 = vmatprep.subr.mxu0 0.0
        %500 = vmatpush1.msra.mxu0 0.0
        %501 = vmatprep.subr.mxu0 0.0
        %502 = vmatpush1.msra.mxu0 0.0
        %503 = vmatprep.subr.mxu0 0.0
        %504 = vmatpush1.msra.mxu0 0.0
        %505 = vmatprep.mubr.f32.mxu0 0.0
        %506 = vmatmul.mubr.f32.gmra.mrb[0].mxu0 %v436
        %v507 = vpop.f32.mrb[0].mxu0
        %v508 = vadd.f32 0.0, %v507
        %v509 = vpop.f32.mrb[0].mxu0
        %510 = vmatprep.mubr.f32.mxu0 0.0
        %511 = vmatmul.mubr.f32.gmra.mrb[0].mxu0 %v439
        %v512 = vpop.f32.mrb[0].mxu0
        %v513 = vadd.f32 0.0, %v512
        %v514 = vpop.f32.mrb[0].mxu0
        %515 = vdwg.mxu0
        %v517 = vsel %vm434, %v422, 0
        %v520 = vsel %vm434, %v423, 0
        %522 = vmatprep.subr.mxu0 0.0
        %523 = vmatpush1.msra.mxu0 %v424
        %524 = vmatprep.subr.mxu0 0.0
        %525 = vmatpush1.msra.mxu0 %v425
        %526 = vmatprep.subr.mxu0 0.0
        %527 = vmatpush1.msra.mxu0 %v426
        %528 = vmatprep.subr.mxu0 0.0
        %529 = vmatpush1.msra.mxu0 %v427
        %530 = vmatprep.subr.mxu0 0.0
        %531 = vmatpush1.msra.mxu0 0.0
        %532 = vmatprep.subr.mxu0 0.0
        %533 = vmatpush1.msra.mxu0 0.0
        %534 = vmatprep.subr.mxu0 0.0
        %535 = vmatpush1.msra.mxu0 0.0
        %536 = vmatprep.subr.mxu0 0.0
        %537 = vmatpush1.msra.mxu0 0.0
        %538 = vmatprep.subr.mxu0 0.0
        %539 = vmatpush1.msra.mxu0 0.0
        %540 = vmatprep.subr.mxu0 0.0
        %541 = vmatpush1.msra.mxu0 0.0
        %542 = vmatprep.subr.mxu0 0.0
        %543 = vmatpush1.msra.mxu0 0.0
        %544 = vmatprep.subr.mxu0 0.0
        %545 = vmatpush1.msra.mxu0 0.0
        %546 = vmatprep.subr.mxu0 0.0
        %547 = vmatpush1.msra.mxu0 0.0
        %548 = vmatprep.subr.mxu0 0.0
        %549 = vmatpush1.msra.mxu0 0.0
        %550 = vmatprep.subr.mxu0 0.0
        %551 = vmatpush1.msra.mxu0 0.0
        %552 = vmatprep.subr.mxu0 0.0
        %553 = vmatpush1.msra.mxu0 0.0
        %554 = vmatprep.subr.mxu0 0.0
        %555 = vmatpush1.msra.mxu0 0.0
        %556 = vmatprep.subr.mxu0 0.0
        %557 = vmatpush1.msra.mxu0 0.0
        %558 = vmatprep.subr.mxu0 0.0
        %559 = vmatpush1.msra.mxu0 0.0
        %560 = vmatprep.subr.mxu0 0.0
        %561 = vmatpush1.msra.mxu0 0.0
        %562 = vmatprep.subr.mxu0 0.0
        %563 = vmatpush1.msra.mxu0 0.0
        %564 = vmatprep.subr.mxu0 0.0
        %565 = vmatpush1.msra.mxu0 0.0
        %566 = vmatprep.subr.mxu0 0.0
        %567 = vmatpush1.msra.mxu0 0.0
        %568 = vmatprep.subr.mxu0 0.0
        %569 = vmatpush1.msra.mxu0 0.0
        %570 = vmatprep.subr.mxu0 0.0
        %571 = vmatpush1.msra.mxu0 0.0
        %572 = vmatprep.subr.mxu0 0.0
        %573 = vmatpush1.msra.mxu0 0.0
        %574 = vmatprep.subr.mxu0 0.0
        %575 = vmatpush1.msra.mxu0 0.0
        %576 = vmatprep.subr.mxu0 0.0
        %577 = vmatpush1.msra.mxu0 0.0
        %578 = vmatprep.subr.mxu0 0.0
        %579 = vmatpush1.msra.mxu0 0.0
        %580 = vmatprep.subr.mxu0 0.0
        %581 = vmatpush1.msra.mxu0 0.0
        %582 = vmatprep.subr.mxu0 0.0
        %583 = vmatpush1.msra.mxu0 0.0
        %584 = vmatprep.subr.mxu0 0.0
        %585 = vmatpush1.msra.mxu0 0.0
        %586 = vmatprep.mubr.f32.mxu0 0.0
        %587 = vmatmul.mubr.f32.gmra.mrb[0].mxu0 %v517
        %v588 = vpop.f32.mrb[0].mxu0
        %v589 = vadd.f32 %v508, %v588
        %v590 = vpop.f32.mrb[0].mxu0
        %591 = vmatprep.mubr.f32.mxu0 0.0
        %592 = vmatmul.mubr.f32.gmra.mrb[0].mxu0 %v520
        %v593 = vpop.f32.mrb[0].mxu0
        %v594 = vadd.f32 %v513, %v593
        %v595 = vpop.f32.mrb[0].mxu0
        %596 = vdwg.mxu0
        %v597 = vld [vmem:[%s365] sm:$0xff]
        %v598 = vld [vmem:[%s365 + $0x8] sm:$0xff]
        %v599 = vld [vmem:[#allocation11] sm:$0xff]
        %v600 = vld [vmem:[#allocation11 + $0x8] sm:$0xff]
        %v601 = vld [vmem:[#allocation11 + $0x10] sm:$0xff]
        %v602 = vld [vmem:[#allocation11 + $0x18] sm:$0xff]
        %v604 = vsel %vm434, %v597, 0
        %v607 = vsel %vm434, %v598, 0
        %609 = vmatprep.subr.mxu0 0.0
        %610 = vmatpush1.msra.mxu0 %v599
        %611 = vmatprep.subr.mxu0 0.0
        %612 = vmatpush1.msra.mxu0 %v600
        %613 = vmatprep.subr.mxu0 0.0
        %614 = vmatpush1.msra.mxu0 %v601
        %615 = vmatprep.subr.mxu0 0.0
        %616 = vmatpush1.msra.mxu0 %v602
        %617 = vmatprep.subr.mxu0 0.0
        %618 = vmatpush1.msra.mxu0 0.0
        %619 = vmatprep.subr.mxu0 0.0
        %620 = vmatpush1.msra.mxu0 0.0
        %621 = vmatprep.subr.mxu0 0.0
        %622 = vmatpush1.msra.mxu0 0.0
        %623 = vmatprep.subr.mxu0 0.0
        %624 = vmatpush1.msra.mxu0 0.0
        %625 = vmatprep.subr.mxu0 0.0
        %626 = vmatpush1.msra.mxu0 0.0
        %627 = vmatprep.subr.mxu0 0.0
        %628 = vmatpush1.msra.mxu0 0.0
        %629 = vmatprep.subr.mxu0 0.0
        %630 = vmatpush1.msra.mxu0 0.0
        %631 = vmatprep.subr.mxu0 0.0
        %632 = vmatpush1.msra.mxu0 0.0
        %633 = vmatprep.subr.mxu0 0.0
        %634 = vmatpush1.msra.mxu0 0.0
        %635 = vmatprep.subr.mxu0 0.0
        %636 = vmatpush1.msra.mxu0 0.0
        %637 = vmatprep.subr.mxu0 0.0
        %638 = vmatpush1.msra.mxu0 0.0
        %639 = vmatprep.subr.mxu0 0.0
        %640 = vmatpush1.msra.mxu0 0.0
        %641 = vmatprep.subr.mxu0 0.0
        %642 = vmatpush1.msra.mxu0 0.0
        %643 = vmatprep.subr.mxu0 0.0
        %644 = vmatpush1.msra.mxu0 0.0
        %645 = vmatprep.subr.mxu0 0.0
        %646 = vmatpush1.msra.mxu0 0.0
        %647 = vmatprep.subr.mxu0 0.0
        %648 = vmatpush1.msra.mxu0 0.0
        %649 = vmatprep.subr.mxu0 0.0
        %650 = vmatpush1.msra.mxu0 0.0
        %651 = vmatprep.subr.mxu0 0.0
        %652 = vmatpush1.msra.mxu0 0.0
        %653 = vmatprep.subr.mxu0 0.0
        %654 = vmatpush1.msra.mxu0 0.0
        %655 = vmatprep.subr.mxu0 0.0
        %656 = vmatpush1.msra.mxu0 0.0
        %657 = vmatprep.subr.mxu0 0.0
        %658 = vmatpush1.msra.mxu0 0.0
        %659 = vmatprep.subr.mxu0 0.0
        %660 = vmatpush1.msra.mxu0 0.0
        %661 = vmatprep.subr.mxu0 0.0
        %662 = vmatpush1.msra.mxu0 0.0
        %663 = vmatprep.subr.mxu0 0.0
        %664 = vmatpush1.msra.mxu0 0.0
        %665 = vmatprep.subr.mxu0 0.0
        %666 = vmatpush1.msra.mxu0 0.0
        %667 = vmatprep.subr.mxu0 0.0
        %668 = vmatpush1.msra.mxu0 0.0
        %669 = vmatprep.subr.mxu0 0.0
        %670 = vmatpush1.msra.mxu0 0.0
        %671 = vmatprep.subr.mxu0 0.0
        %672 = vmatpush1.msra.mxu0 0.0
        %673 = vmatprep.mubr.f32.mxu0 0.0
        %674 = vmatmul.mubr.f32.gmra.mrb[0].mxu0 %v604
        %v675 = vpop.f32.mrb[0].mxu0
        %v676 = vadd.f32 0.0, %v675
        %v677 = vpop.f32.mrb[0].mxu0
        %678 = vmatprep.mubr.f32.mxu0 0.0
        %679 = vmatmul.mubr.f32.gmra.mrb[0].mxu0 %v607
        %v680 = vpop.f32.mrb[0].mxu0
        %v681 = vadd.f32 0.0, %v680
        %v682 = vpop.f32.mrb[0].mxu0
        %683 = vdwg.mxu0
        %v684 = vadd.f32 %v589, %v676
        %v685 = vadd.f32 %v594, %v681
        %v686 = vld [vmem:[%s6] sm:$0x1]
        %v688 = vlaneseq
        %v689 = vshrl.u32 %v688, 7
        %v690 = vsub.s32 0, %v689
        %v691 = vrot.slane %v686, %v690
        %v693 = vadd.f32 %v684, %v691
        %v694 = vadd.f32 %v685, %v691
        %v695 = vsub.f32 0.0, %v693
        %v696 = vsub.f32 0.0, %v694
        %v697 = vmul.f32 %v695, 1.442695
        %v698 = vpow.pop %v697
        %v699 = vmul.f32 %v696, 1.442695
        %v700 = vpow.pop %v699
        %v701 = vadd.f32 %v698, 1.0
        %v702 = vadd.f32 %v700, 1.0
        %v703 = vrcp.pop %v701
        %v704 = vrcp.pop %v702
        %v705 = vtanh.pop %v693
        %v706 = vtanh.pop %v694
        %709 = vrot.lane.b32.xlu0 %v703, 96
        %v710 = vpop.permute.xlu0 %709
        %711 = vrot.lane.b32.xlu0 %v704, 96
        %v712 = vpop.permute.xlu0 %711
        %v715 = vmul.f32 %v705, %v710
        %v716 = vmul.f32 %v706, %v712
        %717 = vst.msk [vmem:[%s417] sm:$0xff] %vm434, %v715
        %718 = vst.msk [vmem:[%s417 + $0x8] sm:$0xff] %vm434, %v716
        %s719 = sand.u32 %s199, 1
        %s720 = scalar_lea.sflag [#allocation4], %s719
        %s721 = sand.u32 %s199, 1
        %s722 = smul.addr %s721, 16
        %s723 = scalar_lea.vmem [#allocation13], %s722
        // Predicated region
        $region73: #{tpu_custom_call.1} parent=47 // pred_check
          %p724 = pneg %p209
        $region74: #{tpu_custom_call.1} parent=47 // pred_check_branch
          %726 = sbr.rel (%p724) target = $region76
        $region75: #{tpu_custom_call.1} parent=47 // pred_region
          %s727 = smul.u32 2, %s29
          %s729 = ssub.s32 256, 256
          %730 = vsyncadd %s720, %s729
          %s731 = smul.addr %s727, 128
          %s732 = scalar_lea.hbm %s7, %s731
          %s733 = sshll.u32 %s723, 4
          %s734 = int_to_ptr.vmem [resolvable:$true] %s733
          %739 = dma.vmem_to_hbm [thread:$0]  %s734, 256, %s732, %s720, 128, 128, 8
        $region76: #{tpu_custom_call.1} parent=47 // pred_fallthru
          _
      $region48: #{tpu_custom_call.1} parent=5 // pred_fallthru
        _
      %p740 = scmp.le.s32.totalorder 2, %s24
      // Predicated region
      $region77: #{tpu_custom_call.1} parent=5 // pred_check
        %p741 = pneg %p740
      $region78: #{tpu_custom_call.1} parent=5 // pred_check_branch
        %743 = sbr.rel (%p741) target = $region80
      $region79: #{tpu_custom_call.1} parent=5 // pred_region
        %s744 = ssub.s32 %s24, 2
        // Predicated region
        $region81: #{tpu_custom_call.1} parent=79 // pred_check
          %p745 = pneg %p215
        $region82: #{tpu_custom_call.1} parent=79 // pred_check_branch
          %747 = sbr.rel (%p745) target = $region84
        $region83: #{tpu_custom_call.1} parent=79 // pred_region
          %s748 = sand.u32 %s200, 1
          %s749 = scalar_lea.sflag [#allocation4], %s748
          %s750 = sand.u32 %s200, 1
          %s751 = smul.addr %s750, 16
          %s752 = scalar_lea.vmem [#allocation13], %s751
          %753 = dma.done %s749, 256
        $region84: #{tpu_custom_call.1} parent=79 // pred_fallthru
          _
      $region80: #{tpu_custom_call.1} parent=5 // pred_fallthru
        _
    $region6: #{tpu_custom_call.1} parent=1 // loop_footer
      %s28 = sadd.s32 1, %s24
    $region7: #{tpu_custom_call.1} parent=1 // loop_footer_branch
      %23 = sbr.rel target = $region3
    $region8: #{tpu_custom_call.1} parent=1 // loop_exit
      _
    %754 = vsyncpa [#allocation3], 1
    %s755 = scalar_lea.sflag [#allocation3], 1
    %756 = vsyncpa %s755, 1
    %757 = vsyncpa [#allocation6], 1
    %s758 = scalar_lea.sflag [#allocation6], 1
    %759 = vsyncpa %s758, 1
    %760 = vsyncpa [#allocation9], 1
    %761 = vsyncpa [#allocation12], 1
    %762 = vsyncpa [#allocation4], 1
    %s763 = scalar_lea.sflag [#allocation4], 1
    %764 = vsyncpa %s763, 1

</llo_original>
